<compile_context>
chip_gen: v7x
topology: tpu7x:2x2x1
jax: 0.10.0
libtpu: 0.0.40
codegen_flags: <defaults>
</compile_context>

<pallas_src>
import numpy as np
import jax
import jax.numpy as jnp
from jax import lax
from jax.experimental import pallas as pl
from jax.experimental.pallas import tpu as pltpu


# ----------------------------- mel config (deterministic, in-script) ------------------
SAMPLE_RATE = 16000
N_FFT = 64
HOP = 16
WIN_LENGTH = 64
N_MELS = 16
FMIN = 0.0
FMAX = SAMPLE_RATE / 2.0

HALF = 64                       # lane offset of the sin half in the fused basis
FUSED_W = 2 * HALF              # 128 lanes: [cos | pad | sin | pad]
N_FREQ = N_FFT // 2 + 1         # 33


def _hann_window(n):
    # periodic Hann window (matches torch.hann_window default periodic=True)
    return 0.5 - 0.5 * np.cos(2.0 * np.pi * np.arange(n) / n)


def _hz_to_mel(f):
    return 2595.0 * np.log10(1.0 + f / 700.0)


def _mel_to_hz(m):
    return 700.0 * (10.0 ** (m / 2595.0) - 1.0)


def make_mel_filterbank(n_mels, n_fft, sr, fmin, fmax):
    n_freq = n_fft // 2 + 1
    fft_freqs = np.linspace(0.0, sr / 2.0, n_freq)
    mel_pts = np.linspace(_hz_to_mel(fmin), _hz_to_mel(fmax), n_mels + 2)
    hz_pts = _mel_to_hz(mel_pts)
    fb = np.zeros((n_mels, n_freq), dtype=np.float64)
    for m in range(n_mels):
        lo, ctr, hi = hz_pts[m], hz_pts[m + 1], hz_pts[m + 2]
        up = (fft_freqs - lo) / max(ctr - lo, 1e-10)
        down = (hi - fft_freqs) / max(hi - ctr, 1e-10)
        fb[m] = np.maximum(0.0, np.minimum(up, down))
    return fb.astype(np.float32)  # (n_mels, n_freq)


def make_dft_basis(n_fft):
    # Windowed real-DFT basis: X[k] = sum_n w[n] x[n] exp(-i 2 pi k n / N)
    n_freq = n_fft // 2 + 1
    n = np.arange(n_fft)[:, None]
    k = np.arange(n_freq)[None, :]
    ang = 2.0 * np.pi * n * k / n_fft
    w = _hann_window(n_fft)[:, None]
    cos_b = (w * np.cos(ang)).astype(np.float32)   # (n_fft, n_freq)
    sin_b = (-w * np.sin(ang)).astype(np.float32)  # (n_fft, n_freq)
    return cos_b, sin_b


def make_fused_basis():
    # (N_FFT, 128): cos in lanes [0, N_FREQ), sin in lanes [HALF, HALF+N_FREQ), zeros elsewhere.
    cos_b, sin_b = make_dft_basis(N_FFT)
    basis = np.zeros((N_FFT, FUSED_W), dtype=np.float32)
    basis[:, :N_FREQ] = cos_b
    basis[:, HALF:HALF + N_FREQ] = sin_b
    return basis


def make_padded_melfb():
    # (HALF, 128): real filterbank^T in rows [0, N_FREQ) x cols [0, N_MELS); zeros elsewhere.
    fb = make_mel_filterbank(N_MELS, N_FFT, SAMPLE_RATE, FMIN, FMAX)   # (n_mels, n_freq)
    fb_pad = np.zeros((HALF, FUSED_W), dtype=np.float32)
    fb_pad[:N_FREQ, :N_MELS] = fb.T
    return fb_pad


# ----------------------------- Pallas wrapper + kernel --------------------------------
def mel_l1_loss(audio_hat, spectrogram):
    """audio_hat: (B, T) float32.  spectrogram: (B, n_mels, frames) float32 (target)."""
    B, T = audio_hat.shape

    # --- glue: reflect pad + frame extraction (matches HiFi-GAN padding + center=False)
    pad = (N_FFT - HOP) // 2
    padded = jnp.pad(audio_hat, ((0, 0), (pad, pad)), mode="reflect")
    n_frames = 1 + (T + 2 * pad - N_FFT) // HOP
    idx = (jnp.arange(n_frames)[:, None] * HOP + jnp.arange(N_FFT)[None, :])  # (frames, n_fft)
    frames = padded[:, idx].reshape(B * n_frames, N_FFT).astype(jnp.float32)

    # target to frames-major layout: (B, n_mels, frames) -> (B*frames, n_mels)
    tgt = jnp.transpose(spectrogram, (0, 2, 1)).reshape(B * n_frames, N_MELS).astype(jnp.float32)

    F_total = B * n_frames

    # --- tiling over the frame axis
    TF = 512
    if F_total < TF:
        TF = max(8, ((F_total + 7) // 8) * 8)
    G = (F_total + TF - 1) // TF
    F_pad = G * TF
    if F_pad != F_total:
        frames = jnp.pad(frames, ((0, F_pad - F_total), (0, 0)))
        tgt = jnp.pad(tgt, ((0, F_pad - F_total), (0, 0)))

    basis = jnp.asarray(make_fused_basis())      # (N_FFT, 128), resident
    melfb = jnp.asarray(make_padded_melfb())     # (HALF,  128), resident

    def kernel(frames_ref, basis_ref, melfb_ref, tgt_ref, out_ref):
        # frames_ref : (TF, N_FFT)    VMEM  (streamed per tile)
        # basis_ref  : (N_FFT, 128)   VMEM  (resident)
        # melfb_ref  : (HALF, 128)    VMEM  (resident)
        # tgt_ref    : (TF, N_MELS)   VMEM  (streamed per tile)
        # out_ref    : (1, 128)       VMEM  (per-tile partial sum, lane-broadcast)
        x = frames_ref[...]
        st = jnp.dot(x, basis_ref[...], preferred_element_type=jnp.float32)   # (TF, 128)
        re = st[:, :HALF]
        im = st[:, HALF:]
        mag = jnp.sqrt(re * re + im * im + 1e-9)                              # (TF, HALF)
        mel = jnp.dot(mag, melfb_ref[...], preferred_element_type=jnp.float32)  # (TF, 128)
        logmel = jnp.log(jnp.maximum(mel, 1e-5))                              # spectral_normalize
        diff = jnp.abs(logmel[:, :N_MELS] - tgt_ref[...])                     # (TF, N_MELS)
        # mask out pad rows of the last tile
        rows = lax.broadcasted_iota(jnp.int32, diff.shape, 0) + pl.program_id(0) * TF
        diff = jnp.where(rows < F_total, diff, 0.0)
        out_ref[...] = jnp.broadcast_to(jnp.sum(diff), (1, FUSED_W))

    partials = pl.pallas_call(
        kernel,
        out_shape=jax.ShapeDtypeStruct((1, FUSED_W * G), jnp.float32),
        grid=(G,),
        in_specs=[
            pl.BlockSpec((TF, N_FFT), lambda i: (i, 0)),       # frames tile
            pl.BlockSpec((N_FFT, FUSED_W), lambda i: (0, 0)),  # fused DFT basis (resident)
            pl.BlockSpec((HALF, FUSED_W), lambda i: (0, 0)),   # padded mel fb (resident)
            pl.BlockSpec((TF, N_MELS), lambda i: (i, 0)),      # target tile
        ],
        out_specs=pl.BlockSpec((1, FUSED_W), lambda i: (0, i)),
        compiler_params=pltpu.CompilerParams(
            dimension_semantics=("parallel",)),
    )(frames, basis, melfb, tgt)

    # every lane of each tile's block holds the same partial sum -> take lane 0 per tile.
    total = jnp.sum(partials.reshape(G, FUSED_W)[:, 0])
    return total / float(F_total * N_MELS)          # L1Loss(reduction='mean')


# ----------------------------- pure-JAX reference (for sanity) ------------------------
def mel_l1_loss_ref(audio_hat, spectrogram):
    B, T = audio_hat.shape
    pad = (N_FFT - HOP) // 2
    padded = jnp.pad(audio_hat, ((0, 0), (pad, pad)), mode="reflect")
    n_frames = 1 + (T + 2 * pad - N_FFT) // HOP
    idx = (jnp.arange(n_frames)[:, None] * HOP + jnp.arange(N_FFT)[None, :])
    frames = padded[:, idx].reshape(B * n_frames, N_FFT)
    cos_b, sin_b = make_dft_basis(N_FFT)
    mel_fb = make_mel_filterbank(N_MELS, N_FFT, SAMPLE_RATE, FMIN, FMAX)
    re = frames @ jnp.asarray(cos_b)
    im = frames @ jnp.asarray(sin_b)
    mag = jnp.sqrt(re * re + im * im + 1e-9)
    mel = mag @ jnp.asarray(mel_fb.T)
    logmel = jnp.log(jnp.maximum(mel, 1e-5))
    tgt = jnp.transpose(spectrogram, (0, 2, 1)).reshape(B * n_frames, N_MELS)
    return jnp.mean(jnp.abs(logmel - tgt))


if __name__ == "__main__":
    key = jax.random.PRNGKey(0)
    k1, k2 = jax.random.split(key)

    B, T = 2, 256
    pad = (N_FFT - HOP) // 2
    n_frames = 1 + (T + 2 * pad - N_FFT) // HOP   # = 16

    audio_hat = jax.random.normal(k1, (B, T), dtype=jnp.float32) * 0.1
    spectrogram = jax.random.normal(k2, (B, N_MELS, n_frames), dtype=jnp.float32)

    loss = jax.block_until_ready(mel_l1_loss(audio_hat, spectrogram))
    ref = jax.block_until_ready(mel_l1_loss_ref(audio_hat, spectrogram))
    assert jnp.isfinite(loss), "loss is not finite"
    assert abs(float(loss) - float(ref)) < 1e-3, (float(loss), float(ref))
    print("KERNEL_OK")
</pallas_src>

<mosaic_0001>
module attributes {stable_mosaic.version = 11 : i64} {
  func.func @kernel(%arg0: i32, %arg1: memref<32x64xf32, #tpu.memory_space<vmem>>, %arg2: memref<64x128xf32, #tpu.memory_space<vmem>>, %arg3: memref<64x128xf32, #tpu.memory_space<vmem>>, %arg4: memref<32x16xf32, #tpu.memory_space<vmem>>, %arg5: memref<1x128xf32, #tpu.memory_space<vmem>>) attributes {dimension_semantics = [#tpu.dimension_semantics<parallel>], iteration_bounds = array<i64: 1>, scalar_prefetch = 0 : i64, scratch_operands = 0 : i64, tpu.core_type = #tpu.core_type<tc>, window_params = [{transform_indices = @transform_0, window_bounds = array<i64: 32, 64>}, {pipeline_mode = #tpu.pipeline_mode<synchronous>, transform_indices = @transform_1, window_bounds = array<i64: 64, 128>}, {pipeline_mode = #tpu.pipeline_mode<synchronous>, transform_indices = @transform_2, window_bounds = array<i64: 64, 128>}, {transform_indices = @transform_3, window_bounds = array<i64: 32, 16>}, {transform_indices = @transform_4, window_bounds = array<i64: 1, 128>}]} {
    %c0 = arith.constant 0 : index
    %c0_0 = arith.constant 0 : index
    %0 = vector.load %arg1[%c0, %c0_0] : memref<32x64xf32, #tpu.memory_space<vmem>>, vector<32x64xf32>
    %c0_1 = arith.constant 0 : index
    %c0_2 = arith.constant 0 : index
    %1 = vector.load %arg2[%c0_1, %c0_2] : memref<64x128xf32, #tpu.memory_space<vmem>>, vector<64x128xf32>
    %cst = arith.constant dense<0.000000e+00> : vector<32x128xf32>
    %2 = tpu.matmul %0, %1, %cst {dimension_numbers = #tpu.dot_dimension_numbers<[1], [0], [0], [1], [0, 0, 1, 1], [], []>} : vector<32x64xf32>, vector<64x128xf32>, vector<32x128xf32> -> vector<32x128xf32>
    %3 = vector.extract_strided_slice %2 {offsets = [0, 0], sizes = [32, 64], strides = [1, 1]} : vector<32x128xf32> to vector<32x64xf32>
    %4 = vector.extract_strided_slice %2 {offsets = [0, 64], sizes = [32, 64], strides = [1, 1]} : vector<32x128xf32> to vector<32x64xf32>
    %5 = arith.mulf %3, %3 : vector<32x64xf32>
    %6 = arith.mulf %4, %4 : vector<32x64xf32>
    %7 = arith.addf %5, %6 : vector<32x64xf32>
    %cst_3 = arith.constant 9.99999971E-10 : f32
    %8 = vector.broadcast %cst_3 : f32 to vector<32x64xf32>
    %9 = arith.addf %7, %8 : vector<32x64xf32>
    %10 = math.sqrt %9 : vector<32x64xf32>
    %c0_4 = arith.constant 0 : index
    %c0_5 = arith.constant 0 : index
    %11 = vector.load %arg3[%c0_4, %c0_5] : memref<64x128xf32, #tpu.memory_space<vmem>>, vector<64x128xf32>
    %cst_6 = arith.constant dense<0.000000e+00> : vector<32x128xf32>
    %12 = tpu.matmul %10, %11, %cst_6 {dimension_numbers = #tpu.dot_dimension_numbers<[1], [0], [0], [1], [0, 0, 1, 1], [], []>} : vector<32x64xf32>, vector<64x128xf32>, vector<32x128xf32> -> vector<32x128xf32>
    %cst_7 = arith.constant 9.99999974E-6 : f32
    %13 = vector.broadcast %cst_7 : f32 to vector<32x128xf32>
    %14 = arith.maximumf %12, %13 : vector<32x128xf32>
    %15 = math.log %14 : vector<32x128xf32>
    %16 = vector.extract_strided_slice %15 {offsets = [0, 0], sizes = [32, 16], strides = [1, 1]} : vector<32x128xf32> to vector<32x16xf32>
    %c0_8 = arith.constant 0 : index
    %c0_9 = arith.constant 0 : index
    %17 = vector.load %arg4[%c0_8, %c0_9] : memref<32x16xf32, #tpu.memory_space<vmem>>, vector<32x16xf32>
    %18 = arith.subf %16, %17 : vector<32x16xf32>
    %19 = math.absf %18 : vector<32x16xf32>
    %20 = tpu.iota {dimensions = array<i32: 0>} : vector<32x16xi32>
    %c32_i32 = arith.constant 32 : i32
    %21 = arith.muli %arg0, %c32_i32 : i32
    %22 = vector.broadcast %21 : i32 to vector<32x16xi32>
    %23 = arith.addi %20, %22 : vector<32x16xi32>
    %c32_i32_10 = arith.constant 32 : i32
    %24 = vector.broadcast %c32_i32_10 : i32 to vector<32x16xi32>
    %25 = arith.cmpi slt, %23, %24 : vector<32x16xi32>
    %cst_11 = arith.constant 0.000000e+00 : f32
    %26 = vector.broadcast %cst_11 : f32 to vector<32x16xf32>
    %27 = arith.select %25, %19, %26 : vector<32x16xi1>, vector<32x16xf32>
    %28 = vector.shape_cast %27 : vector<32x16xf32> to vector<1x32x16xf32>
    %cst_12 = arith.constant dense<0.000000e+00> : vector<1xf32>
    %29 = vector.multi_reduction <add>, %28, %cst_12 [1, 2] : vector<1x32x16xf32> to vector<1xf32>
    %30 = vector.shape_cast %29 : vector<1xf32> to vector<1x1x1xf32>
    %31 = vector.extract %30[0, 0, 0] : f32 from vector<1x1x1xf32>
    %32 = vector.broadcast %31 : f32 to vector<1x128xf32>
    %c0_13 = arith.constant 0 : index
    %c0_14 = arith.constant 0 : index
    %33 = vector.load %arg5[%c0_13, %c0_14] : memref<1x128xf32, #tpu.memory_space<vmem>>, vector<1x128xf32>
    tpu.vector_store %arg5[%c0_13, %c0_14], %32 {strides = array<i32>} : memref<1x128xf32, #tpu.memory_space<vmem>>, vector<1x128xf32>,
    return
  }
  func.func @transform_0(%arg0: i32) -> (i32, i32) {
    %c0_i32 = arith.constant 0 : i32
    %c0_i32_0 = arith.constant 0 : i32
    return %arg0, %c0_i32 : i32, i32
  }
  func.func @transform_1(%arg0: i32) -> (i32, i32) {
    %c0_i32 = arith.constant 0 : i32
    %c0_i32_0 = arith.constant 0 : i32
    %c0_i32_1 = arith.constant 0 : i32
    return %c0_i32, %c0_i32_0 : i32, i32
  }
  func.func @transform_2(%arg0: i32) -> (i32, i32) {
    %c0_i32 = arith.constant 0 : i32
    %c0_i32_0 = arith.constant 0 : i32
    %c0_i32_1 = arith.constant 0 : i32
    return %c0_i32, %c0_i32_0 : i32, i32
  }
  func.func @transform_3(%arg0: i32) -> (i32, i32) {
    %c0_i32 = arith.constant 0 : i32
    %c0_i32_0 = arith.constant 0 : i32
    return %arg0, %c0_i32 : i32, i32
  }
  func.func @transform_4(%arg0: i32) -> (i32, i32) {
    %c0_i32 = arith.constant 0 : i32
    %c0_i32_0 = arith.constant 0 : i32
    return %c0_i32, %arg0 : i32, i32
  }
}

</mosaic_0001>

<llo_original>
// kernel: tpu_custom_call.1
$region0: #{tpu_custom_call.1}
  #allocation0 [shape = 'u32[]', space=smem, size = 0x4, offset = 0x4, fixed_abs, tag = 'smem constant byte address 0x4 - core index']
  #allocation1 [shape = 'u32[144,128]{1,0:T(1,128)}', space=vmem, size = 0x12000, scoped, tag = 'internal scratch']
  %s0 = inlined_call_operand.vmem [shape: f32[32,64], index: 0, kind: input, shape index: {}]
  %s1 = inlined_call_operand.hbm [shape: f32[64,128], index: 1, kind: input, shape index: {}]
  %s2 = inlined_call_operand.hbm [shape: f32[64,128], index: 2, kind: input, shape index: {}]
  %s3 = inlined_call_operand.vmem [shape: f32[32,16], index: 3, kind: input, shape index: {}]
  %s4 = inlined_call_operand.hbm [shape: f32[1,128], index: 4, kind: output, shape index: {}]
  %s5 = sld [smem:[#allocation0]]
  $region34: #{tpu_custom_call.1} parent=0
    _
  %s7 = ssub.s32 1, %s5
  %s8 = scalar_select 0, %s7, %s5
  $region1: #{tpu_custom_call.1} parent=0
    #allocation2 [shape = 'u8[32768]{0}', space=vmem, size = 0x8000, scoped, tag = 'input window, operand 1, single buffered']
    #allocation3 [shape = 's32[1]{0}', space=sflag, size = 0x4, scoped, tag = 'scoped memory for tpu_custom_call.1']
    #allocation4 [shape = 's32[1]{0}', space=sflag, size = 0x4, scoped, tag = 'scoped memory for tpu_custom_call.1']
    #allocation5 [shape = 'u8[32768]{0}', space=vmem, size = 0x8000, scoped, tag = 'input window, operand 2, single buffered']
    #allocation6 [shape = 's32[1]{0}', space=sflag, size = 0x4, scoped, tag = 'scoped memory for tpu_custom_call.1']
    #allocation7 [shape = 'u8[512]{0}', space=vmem, size = 0x400, scoped, tag = 'output window, operand 0, single buffered']
    %9 = vsyncpa [#allocation3], 0
    %10 = vsyncpa [#allocation6], 0
    %11 = vsyncpa [#allocation4], 0
    // Predicated region
    $region2: #{tpu_custom_call.1} parent=1 // pred_check
      _
    $region3: #{tpu_custom_call.1} parent=1 // pred_check_branch
      %13 = sbr.rel (0) target = $region5
    $region4: #{tpu_custom_call.1} parent=1 // pred_region
      _
    $region5: #{tpu_custom_call.1} parent=1 // pred_fallthru
      _
    // Predicated region
    $region6: #{tpu_custom_call.1} parent=1 // pred_check
      _
    $region7: #{tpu_custom_call.1} parent=1 // pred_check_branch
      %15 = sbr.rel (0) target = $region9
    $region8: #{tpu_custom_call.1} parent=1 // pred_region
      %s17 = ssub.s32 1024, 1024
      %18 = vsyncadd [#allocation3], %s17
      %s19 = sshll.u32 [#allocation2], 4
      %s20 = int_to_ptr.vmem [resolvable:$true] %s19
      %25 = dma.hbm_to_vmem [thread:$0]  %s1, 1024, %s20, [#allocation3], 128, 128, 8
    $region9: #{tpu_custom_call.1} parent=1 // pred_fallthru
      _
    // Predicated region
    $region10: #{tpu_custom_call.1} parent=1 // pred_check
      _
    $region11: #{tpu_custom_call.1} parent=1 // pred_check_branch
      %27 = sbr.rel (0) target = $region13
    $region12: #{tpu_custom_call.1} parent=1 // pred_region
      %s29 = ssub.s32 1024, 1024
      %30 = vsyncadd [#allocation6], %s29
      %s31 = sshll.u32 [#allocation5], 4
      %s32 = int_to_ptr.vmem [resolvable:$true] %s31
      %37 = dma.hbm_to_vmem [thread:$0]  %s2, 1024, %s32, [#allocation6], 128, 128, 8
    $region13: #{tpu_custom_call.1} parent=1 // pred_fallthru
      _
    // Predicated region
    $region14: #{tpu_custom_call.1} parent=1 // pred_check
      _
    $region15: #{tpu_custom_call.1} parent=1 // pred_check_branch
      %39 = sbr.rel (0) target = $region17
    $region16: #{tpu_custom_call.1} parent=1 // pred_region
      _
    $region17: #{tpu_custom_call.1} parent=1 // pred_fallthru
      _
    // Predicated region
    $region18: #{tpu_custom_call.1} parent=1 // pred_check
      _
    $region19: #{tpu_custom_call.1} parent=1 // pred_check_branch
      %41 = sbr.rel (0) target = $region21
    $region20: #{tpu_custom_call.1} parent=1 // pred_region
      %42 = dma.done [#allocation3], 1024
    $region21: #{tpu_custom_call.1} parent=1 // pred_fallthru
      _
    // Predicated region
    $region22: #{tpu_custom_call.1} parent=1 // pred_check
      _
    $region23: #{tpu_custom_call.1} parent=1 // pred_check_branch
      %44 = sbr.rel (0) target = $region25
    $region24: #{tpu_custom_call.1} parent=1 // pred_region
      %45 = dma.done [#allocation6], 1024
    $region25: #{tpu_custom_call.1} parent=1 // pred_fallthru
      _
    %v46 = vld [vmem:[%s0] sm:$0xff]
    %v47 = vld [vmem:[%s0 + $0x8] sm:$0xff]
    %v48 = vld [vmem:[%s0 + $0x10] sm:$0xff]
    %v49 = vld [vmem:[%s0 + $0x18] sm:$0xff]
    %v50 = vld [vmem:[#allocation2] sm:$0xff]
    %v51 = vld [vmem:[#allocation2 + $0x8] sm:$0xff]
    %v52 = vld [vmem:[#allocation2 + $0x10] sm:$0xff]
    %v53 = vld [vmem:[#allocation2 + $0x18] sm:$0xff]
    %v54 = vld [vmem:[#allocation2 + $0x20] sm:$0xff]
    %v55 = vld [vmem:[#allocation2 + $0x28] sm:$0xff]
    %v56 = vld [vmem:[#allocation2 + $0x30] sm:$0xff]
    %v57 = vld [vmem:[#allocation2 + $0x38] sm:$0xff]
    %vm58 = vcmask 523264
    %v60 = vsel %vm58, %v46, 0
    %v63 = vsel %vm58, %v47, 0
    %v66 = vsel %vm58, %v48, 0
    %v69 = vsel %vm58, %v49, 0
    %71 = vmatprep.subr.mxu0 0.0
    %72 = vmatpush1.msra.mxu0 %v50
    %73 = vmatprep.subr.mxu0 0.0
    %74 = vmatpush1.msra.mxu0 %v51
    %75 = vmatprep.subr.mxu0 0.0
    %76 = vmatpush1.msra.mxu0 %v52
    %77 = vmatprep.subr.mxu0 0.0
    %78 = vmatpush1.msra.mxu0 %v53
    %79 = vmatprep.subr.mxu0 0.0
    %80 = vmatpush1.msra.mxu0 %v54
    %81 = vmatprep.subr.mxu0 0.0
    %82 = vmatpush1.msra.mxu0 %v55
    %83 = vmatprep.subr.mxu0 0.0
    %84 = vmatpush1.msra.mxu0 %v56
    %85 = vmatprep.subr.mxu0 0.0
    %86 = vmatpush1.msra.mxu0 %v57
    %87 = vmatprep.subr.mxu0 0.0
    %88 = vmatpush1.msra.mxu0 0.0
    %89 = vmatprep.subr.mxu0 0.0
    %90 = vmatpush1.msra.mxu0 0.0
    %91 = vmatprep.subr.mxu0 0.0
    %92 = vmatpush1.msra.mxu0 0.0
    %93 = vmatprep.subr.mxu0 0.0
    %94 = vmatpush1.msra.mxu0 0.0
    %95 = vmatprep.subr.mxu0 0.0
    %96 = vmatpush1.msra.mxu0 0.0
    %97 = vmatprep.subr.mxu0 0.0
    %98 = vmatpush1.msra.mxu0 0.0
    %99 = vmatprep.subr.mxu0 0.0
    %100 = vmatpush1.msra.mxu0 0.0
    %101 = vmatprep.subr.mxu0 0.0
    %102 = vmatpush1.msra.mxu0 0.0
    %103 = vmatprep.subr.mxu0 0.0
    %104 = vmatpush1.msra.mxu0 0.0
    %105 = vmatprep.subr.mxu0 0.0
    %106 = vmatpush1.msra.mxu0 0.0
    %107 = vmatprep.subr.mxu0 0.0
    %108 = vmatpush1.msra.mxu0 0.0
    %109 = vmatprep.subr.mxu0 0.0
    %110 = vmatpush1.msra.mxu0 0.0
    %111 = vmatprep.subr.mxu0 0.0
    %112 = vmatpush1.msra.mxu0 0.0
    %113 = vmatprep.subr.mxu0 0.0
    %114 = vmatpush1.msra.mxu0 0.0
    %115 = vmatprep.subr.mxu0 0.0
    %116 = vmatpush1.msra.mxu0 0.0
    %117 = vmatprep.subr.mxu0 0.0
    %118 = vmatpush1.msra.mxu0 0.0
    %119 = vmatprep.subr.mxu0 0.0
    %120 = vmatpush1.msra.mxu0 0.0
    %121 = vmatprep.subr.mxu0 0.0
    %122 = vmatpush1.msra.mxu0 0.0
    %123 = vmatprep.subr.mxu0 0.0
    %124 = vmatpush1.msra.mxu0 0.0
    %125 = vmatprep.subr.mxu0 0.0
    %126 = vmatpush1.msra.mxu0 0.0
    %127 = vmatprep.subr.mxu0 0.0
    %128 = vmatpush1.msra.mxu0 0.0
    %129 = vmatprep.subr.mxu0 0.0
    %130 = vmatpush1.msra.mxu0 0.0
    %131 = vmatprep.subr.mxu0 0.0
    %132 = vmatpush1.msra.mxu0 0.0
    %133 = vmatprep.subr.mxu0 0.0
    %134 = vmatpush1.msra.mxu0 0.0
    %135 = vmatprep.mubr.f32.mxu0 0.0
    %136 = vmatmul.mubr.f32.gmra.mrb[0].mxu0 %v60
    %v137 = vpop.f32.mrb[0].mxu0
    %v138 = vadd.f32 0.0, %v137
    %v139 = vpop.f32.mrb[0].mxu0
    %140 = vmatprep.mubr.f32.mxu0 0.0
    %141 = vmatmul.mubr.f32.gmra.mrb[0].mxu0 %v63
    %v142 = vpop.f32.mrb[0].mxu0
    %v143 = vadd.f32 0.0, %v142
    %v144 = vpop.f32.mrb[0].mxu0
    %145 = vmatprep.mubr.f32.mxu0 0.0
    %146 = vmatmul.mubr.f32.gmra.mrb[0].mxu0 %v66
    %v147 = vpop.f32.mrb[0].mxu0
    %v148 = vadd.f32 0.0, %v147
    %v149 = vpop.f32.mrb[0].mxu0
    %150 = vmatprep.mubr.f32.mxu0 0.0
    %151 = vmatmul.mubr.f32.gmra.mrb[0].mxu0 %v69
    %v152 = vpop.f32.mrb[0].mxu0
    %v153 = vadd.f32 0.0, %v152
    %v154 = vpop.f32.mrb[0].mxu0
    %155 = vdwg.mxu0
    %v156 = vmul.f32 %v138, %v138
    %v157 = vmul.f32 %v143, %v143
    %v158 = vmul.f32 %v148, %v148
    %v159 = vmul.f32 %v153, %v153
    %164 = vrot.lane.b32.xlu0 %v156, 64
    %v165 = vpop.permute.xlu0 %164
    %166 = vrot.lane.b32.xlu0 %v157, 64
    %v167 = vpop.permute.xlu0 %166
    %168 = vrot.lane.b32.xlu0 %v158, 64
    %v169 = vpop.permute.xlu0 %168
    %170 = vrot.lane.b32.xlu0 %v159, 64
    %v171 = vpop.permute.xlu0 %170
    %v176 = vadd.f32 %v156, %v165
    %v177 = vadd.f32 %v157, %v167
    %v178 = vadd.f32 %v158, %v169
    %v179 = vadd.f32 %v159, %v171
    %v180 = vadd.f32 %v176, 1e-09
    %v181 = vadd.f32 %v177, 1e-09
    %v182 = vadd.f32 %v178, 1e-09
    %v183 = vadd.f32 %v179, 1e-09
    %v184 = vrsqrt.pop %v180
    %v185 = vmul.f32 %v180, %v184
    %vm186 = vcmp.eq.f32.partialorder %v180, inf
    %v187 = vsel %vm186, %v180, %v185
    %vm188 = vcmp.eq.f32.partialorder %v180, 0.0
    %v189 = vand.u32 %v180, 2147483648
    %v190 = vsel %vm188, %v189, %v187
    %v191 = vrsqrt.pop %v181
    %v192 = vmul.f32 %v181, %v191
    %vm193 = vcmp.eq.f32.partialorder %v181, inf
    %v194 = vsel %vm193, %v181, %v192
    %vm195 = vcmp.eq.f32.partialorder %v181, 0.0
    %v196 = vand.u32 %v181, 2147483648
    %v197 = vsel %vm195, %v196, %v194
    %v198 = vrsqrt.pop %v182
    %v199 = vmul.f32 %v182, %v198
    %vm200 = vcmp.eq.f32.partialorder %v182, inf
    %v201 = vsel %vm200, %v182, %v199
    %vm202 = vcmp.eq.f32.partialorder %v182, 0.0
    %v203 = vand.u32 %v182, 2147483648
    %v204 = vsel %vm202, %v203, %v201
    %v205 = vrsqrt.pop %v183
    %v206 = vmul.f32 %v183, %v205
    %vm207 = vcmp.eq.f32.partialorder %v183, inf
    %v208 = vsel %vm207, %v183, %v206
    %vm209 = vcmp.eq.f32.partialorder %v183, 0.0
    %v210 = vand.u32 %v183, 2147483648
    %v211 = vsel %vm209, %v210, %v208
    %v212 = vld [vmem:[#allocation5] sm:$0xff]
    %v213 = vld [vmem:[#allocation5 + $0x8] sm:$0xff]
    %v214 = vld [vmem:[#allocation5 + $0x10] sm:$0xff]
    %v215 = vld [vmem:[#allocation5 + $0x18] sm:$0xff]
    %v216 = vld [vmem:[#allocation5 + $0x20] sm:$0xff]
    %v217 = vld [vmem:[#allocation5 + $0x28] sm:$0xff]
    %v218 = vld [vmem:[#allocation5 + $0x30] sm:$0xff]
    %v219 = vld [vmem:[#allocation5 + $0x38] sm:$0xff]
    %v221 = vsel %vm58, %v190, 0
    %v224 = vsel %vm58, %v197, 0
    %v227 = vsel %vm58, %v204, 0
    %v230 = vsel %vm58, %v211, 0
    %232 = vmatprep.subr.mxu0 0.0
    %233 = vmatpush1.msra.mxu0 %v212
    %234 = vmatprep.subr.mxu0 0.0
    %235 = vmatpush1.msra.mxu0 %v213
    %236 = vmatprep.subr.mxu0 0.0
    %237 = vmatpush1.msra.mxu0 %v214
    %238 = vmatprep.subr.mxu0 0.0
    %239 = vmatpush1.msra.mxu0 %v215
    %240 = vmatprep.subr.mxu0 0.0
    %241 = vmatpush1.msra.mxu0 %v216
    %242 = vmatprep.subr.mxu0 0.0
    %243 = vmatpush1.msra.mxu0 %v217
    %244 = vmatprep.subr.mxu0 0.0
    %245 = vmatpush1.msra.mxu0 %v218
    %246 = vmatprep.subr.mxu0 0.0
    %247 = vmatpush1.msra.mxu0 %v219
    %248 = vmatprep.subr.mxu0 0.0
    %249 = vmatpush1.msra.mxu0 0.0
    %250 = vmatprep.subr.mxu0 0.0
    %251 = vmatpush1.msra.mxu0 0.0
    %252 = vmatprep.subr.mxu0 0.0
    %253 = vmatpush1.msra.mxu0 0.0
    %254 = vmatprep.subr.mxu0 0.0
    %255 = vmatpush1.msra.mxu0 0.0
    %256 = vmatprep.subr.mxu0 0.0
    %257 = vmatpush1.msra.mxu0 0.0
    %258 = vmatprep.subr.mxu0 0.0
    %259 = vmatpush1.msra.mxu0 0.0
    %260 = vmatprep.subr.mxu0 0.0
    %261 = vmatpush1.msra.mxu0 0.0
    %262 = vmatprep.subr.mxu0 0.0
    %263 = vmatpush1.msra.mxu0 0.0
    %264 = vmatprep.subr.mxu0 0.0
    %265 = vmatpush1.msra.mxu0 0.0
    %266 = vmatprep.subr.mxu0 0.0
    %267 = vmatpush1.msra.mxu0 0.0
    %268 = vmatprep.subr.mxu0 0.0
    %269 = vmatpush1.msra.mxu0 0.0
    %270 = vmatprep.subr.mxu0 0.0
    %271 = vmatpush1.msra.mxu0 0.0
    %272 = vmatprep.subr.mxu0 0.0
    %273 = vmatpush1.msra.mxu0 0.0
    %274 = vmatprep.subr.mxu0 0.0
    %275 = vmatpush1.msra.mxu0 0.0
    %276 = vmatprep.subr.mxu0 0.0
    %277 = vmatpush1.msra.mxu0 0.0
    %278 = vmatprep.subr.mxu0 0.0
    %279 = vmatpush1.msra.mxu0 0.0
    %280 = vmatprep.subr.mxu0 0.0
    %281 = vmatpush1.msra.mxu0 0.0
    %282 = vmatprep.subr.mxu0 0.0
    %283 = vmatpush1.msra.mxu0 0.0
    %284 = vmatprep.subr.mxu0 0.0
    %285 = vmatpush1.msra.mxu0 0.0
    %286 = vmatprep.subr.mxu0 0.0
    %287 = vmatpush1.msra.mxu0 0.0
    %288 = vmatprep.subr.mxu0 0.0
    %289 = vmatpush1.msra.mxu0 0.0
    %290 = vmatprep.subr.mxu0 0.0
    %291 = vmatpush1.msra.mxu0 0.0
    %292 = vmatprep.subr.mxu0 0.0
    %293 = vmatpush1.msra.mxu0 0.0
    %294 = vmatprep.subr.mxu0 0.0
    %295 = vmatpush1.msra.mxu0 0.0
    %296 = vmatprep.mubr.f32.mxu0 0.0
    %297 = vmatmul.mubr.f32.gmra.mrb[0].mxu0 %v221
    %v298 = vpop.f32.mrb[0].mxu0
    %v299 = vadd.f32 0.0, %v298
    %v300 = vpop.f32.mrb[0].mxu0
    %301 = vmatprep.mubr.f32.mxu0 0.0
    %302 = vmatmul.mubr.f32.gmra.mrb[0].mxu0 %v224
    %v303 = vpop.f32.mrb[0].mxu0
    %v304 = vadd.f32 0.0, %v303
    %v305 = vpop.f32.mrb[0].mxu0
    %306 = vmatprep.mubr.f32.mxu0 0.0
    %307 = vmatmul.mubr.f32.gmra.mrb[0].mxu0 %v227
    %v308 = vpop.f32.mrb[0].mxu0
    %v309 = vadd.f32 0.0, %v308
    %v310 = vpop.f32.mrb[0].mxu0
    %311 = vmatprep.mubr.f32.mxu0 0.0
    %312 = vmatmul.mubr.f32.gmra.mrb[0].mxu0 %v230
    %v313 = vpop.f32.mrb[0].mxu0
    %v314 = vadd.f32 0.0, %v313
    %v315 = vpop.f32.mrb[0].mxu0
    %316 = vdwg.mxu0
    %v317 = vmax.f32 %v299, 1e-05
    %v318 = vmax.f32 %v304, 1e-05
    %v319 = vmax.f32 %v309, 1e-05
    %v320 = vmax.f32 %v314, 1e-05
    %v321 = vlog2.pop %v317
    %v322 = vmul.f32 %v321, 0.6931472
    %v323 = vlog2.pop %v318
    %v324 = vmul.f32 %v323, 0.6931472
    %v325 = vlog2.pop %v319
    %v326 = vmul.f32 %v325, 0.6931472
    %v327 = vlog2.pop %v320
    %v328 = vmul.f32 %v327, 0.6931472
    %v329 = vld [vmem:[%s3] sm:$0xff]
    %v330 = vld [vmem:[%s3 + $0x8] sm:$0xff]
    %v331 = vld [vmem:[%s3 + $0x10] sm:$0xff]
    %v332 = vld [vmem:[%s3 + $0x18] sm:$0xff]
    %v333 = vsub.f32 %v322, %v329
    %v334 = vsub.f32 %v324, %v330
    %v335 = vsub.f32 %v326, %v331
    %v336 = vsub.f32 %v328, %v332
    %v337 = vand.u32 2147483647, %v333
    %v338 = vand.u32 2147483647, %v334
    %v339 = vand.u32 2147483647, %v335
    %v340 = vand.u32 2147483647, %v336
    %v341 = vlaneseq
    %v342 = vshrl.u32 %v341, 7
    %v343 = vadd.s32 %v342, 8
    %v344 = vadd.s32 %v342, 16
    %v345 = vadd.s32 %v342, 24
    %s346 = smul.u32 0, 32
    %v347 = vstv %s346
    %v348 = vadd.s32 %v342, %v347
    %v349 = vadd.s32 %v343, %v347
    %v350 = vadd.s32 %v344, %v347
    %v351 = vadd.s32 %v345, %v347
    %vm352 = vcmp.lt.s32.totalorder %v348, 32
    %vm353 = vcmp.lt.s32.totalorder %v349, 32
    %vm354 = vcmp.lt.s32.totalorder %v350, 32
    %vm355 = vcmp.lt.s32.totalorder %v351, 32
    %v356 = vsel %vm352, %v337, 0.0
    %v357 = vsel %vm353, %v338, 0.0
    %v358 = vsel %vm354, %v339, 0.0
    %v359 = vsel %vm355, %v340, 0.0
    %vm360 = vcmask 130048
    %v361 = vsel %vm360, %v356, 0.0
    %v362 = vsel %vm360, %v357, 0.0
    %v363 = vadd.f32 %v361, %v362
    %v364 = vsel %vm360, %v358, 0.0
    %v365 = vadd.f32 %v363, %v364
    %v366 = vsel %vm360, %v359, 0.0
    %v367 = vadd.f32 %v365, %v366
    %368 = vadd.xlane.f32.xlu0 %v367
    %v369 = vpop.xlane.xlu0 %368
    %v370 = vrot.slane %v369, 4
    %v371 = vadd.f32 %v369, %v370
    %v372 = vrot.slane %v371, 2
    %v373 = vadd.f32 %v371, %v372
    %v374 = vrot.slane %v373, 1
    %v375 = vadd.f32 %v373, %v374
    %s376 = vtos %v375
    %v377 = vstv %s376
    %378 = vst [vmem:[#allocation7] sm:$0x1] %v377
    // Predicated region
    $region26: #{tpu_custom_call.1} parent=1 // pred_check
      _
    $region27: #{tpu_custom_call.1} parent=1 // pred_check_branch
      %380 = sbr.rel (0) target = $region29
    $region28: #{tpu_custom_call.1} parent=1 // pred_region
      %s382 = ssub.s32 16, 16
      %383 = vsyncadd [#allocation4], %s382
      %s385 = sshll.u32 [#allocation7], 4
      %s386 = int_to_ptr.vmem [resolvable:$true] %s385
      %388 = dma.vmem_to_hbm [thread:$0]  %s386, 16, %s4, [#allocation4]
    $region29: #{tpu_custom_call.1} parent=1 // pred_fallthru
      _
    // Predicated region
    $region30: #{tpu_custom_call.1} parent=1 // pred_check
      _
    $region31: #{tpu_custom_call.1} parent=1 // pred_check_branch
      %390 = sbr.rel (0) target = $region33
    $region32: #{tpu_custom_call.1} parent=1 // pred_region
      %391 = dma.done [#allocation4], 16
    $region33: #{tpu_custom_call.1} parent=1 // pred_fallthru
      _
    %392 = vsyncpa [#allocation3], 1
    %393 = vsyncpa [#allocation6], 1
    %394 = vsyncpa [#allocation4], 1

</llo_original>
